<compile_context>
chip_gen: v5e
topology: v5e:2x2
jax: 0.10.0
libtpu: 0.0.40
codegen_flags: <defaults>
</compile_context>

<pallas_src>
import functools

import jax
import jax.numpy as jnp
from jax.experimental import pallas as pl
from jax.experimental.pallas import tpu as pltpu


def _round_up(x: int, m: int) -> int:
    return ((x + m - 1) // m) * m


def _pad_feature(d: int) -> int:
    # Lane-align small dims to 128; wider dims to 256 so K/N tiles match the 256x256 MXU
    # on v6e/v7x (v5e's 4x128^2 MXU is already saturated at 128).
    return _round_up(d, 128) if d <= 128 else _round_up(d, 256)


def _vmem_capacity_bytes() -> int:
    try:
        info = pltpu.get_tpu_info()
        cap = getattr(info, "vmem_capacity_bytes", None)
        if cap:
            return int(cap)
    except Exception:
        pass
    return 64 * 1024 * 1024  # v7x per-TensorCore VMEM: smallest across generations


def _choose_batch_tile(batch_pad8: int, cap: int = 256) -> int:
    if batch_pad8 <= 8:
        return 8
    if batch_pad8 <= 2 * cap:
        # At least 2 grid steps so the "parallel" batch axis can shard across the two
        # TensorCores of a v7x chip (no effect on single-TC v5e/v6e).
        return min(cap, _round_up(pl.cdiv(batch_pad8, 2), 8))
    return cap


# ----------------------------------------------------------------------------- resident
def _fused_mlp_kernel(*refs, n_layers: int):
    # refs = (x_ref, w0, b0, w1, b1, ..., o_ref)
    x_ref = refs[0]
    o_ref = refs[-1]
    h = x_ref[...].astype(jnp.float32)                       # (TB, IN_pad)
    for i in range(n_layers):                                # static loop -> unrolled
        w = refs[1 + 2 * i][...]                             # bf16 (IN_pad_i, OUT_pad_i)
        b = refs[2 + 2 * i][...]                             # f32  (1, OUT_pad_i)
        # bf16 MXU operands, f32 accumulate; bias-add / ReLU in f32.
        h = jnp.dot(h.astype(jnp.bfloat16), w,
                    preferred_element_type=jnp.float32) + b
        if i < n_layers - 1:
            h = jnp.maximum(h, 0.0)
    o_ref[...] = h.astype(o_ref.dtype)


def _fused_mlp(x_pad, padded_params, *, batch_tile: int, vmem_limit: int):
    b_rows, in_pad = x_pad.shape
    n_layers = len(padded_params)
    out_pad = padded_params[-1][0].shape[1]
    tb = batch_tile
    grid = (pl.cdiv(b_rows, tb),)

    in_specs = [pl.BlockSpec((tb, in_pad), lambda i: (i, 0))]
    flat_args = [x_pad]
    flops = 0
    bytes_accessed = x_pad.size * x_pad.dtype.itemsize + b_rows * out_pad * 4
    for (w, b) in padded_params:
        # Whole-array resident blocks: constant index_map -> single buffer is enough.
        in_specs.append(pl.BlockSpec(w.shape, lambda i: (0, 0),
                                     pipeline_mode=pl.Buffered(1)))
        in_specs.append(pl.BlockSpec(b.shape, lambda i: (0, 0),
                                     pipeline_mode=pl.Buffered(1)))
        flat_args.extend([w, b])
        flops += 2 * b_rows * w.shape[0] * w.shape[1]
        bytes_accessed += w.size * w.dtype.itemsize + b.size * b.dtype.itemsize

    kernel = functools.partial(_fused_mlp_kernel, n_layers=n_layers)
    return pl.pallas_call(
        kernel,
        out_shape=jax.ShapeDtypeStruct((b_rows, out_pad), jnp.float32),
        grid=grid,
        in_specs=in_specs,
        out_specs=pl.BlockSpec((tb, out_pad), lambda i: (i, 0)),
        compiler_params=pltpu.CompilerParams(
            dimension_semantics=("parallel",),
            vmem_limit_bytes=vmem_limit),
        cost_estimate=pl.CostEstimate(
            flops=flops, transcendentals=0, bytes_accessed=bytes_accessed),
    )(*flat_args)


# ----------------------------------------------------------------- K/N-tiled fallback
def _tiled_linear_kernel(x_ref, w_ref, b_ref, o_ref, acc_ref, *, apply_relu: bool):
    k = pl.program_id(2)

    @pl.when(k == 0)
    def _():
        acc_ref[...] = jnp.zeros_like(acc_ref)

    acc_ref[...] += jnp.dot(x_ref[...], w_ref[...],
                            preferred_element_type=jnp.float32)

    @pl.when(k == pl.num_programs(2) - 1)
    def _():
        r = acc_ref[...] + b_ref[...]
        if apply_relu:
            r = jnp.maximum(r, 0.0)
        o_ref[...] = r.astype(o_ref.dtype)


def _tiled_linear(x, w, b, *, apply_relu: bool, out_dtype, batch_tile: int,
                  vmem_limit: int):
    m, kdim = x.shape
    _, n = w.shape
    tm = batch_tile
    # K/N tiles must divide the (already 128/256-padded) dims exactly so the reduction
    # never touches out-of-bounds data.
    tk = 512 if kdim % 512 == 0 else (256 if kdim % 256 == 0 else 128)
    tn = 256 if n % 256 == 0 else 128
    grid = (pl.cdiv(m, tm), n // tn, kdim // tk)

    kernel = functools.partial(_tiled_linear_kernel, apply_relu=apply_relu)
    return pl.pallas_call(
        kernel,
        out_shape=jax.ShapeDtypeStruct((m, n), out_dtype),
        grid=grid,
        in_specs=[
            pl.BlockSpec((tm, tk), lambda i, j, k: (i, k)),
            pl.BlockSpec((tk, tn), lambda i, j, k: (k, j)),
            pl.BlockSpec((1, tn), lambda i, j, k: (0, j)),
        ],
        out_specs=pl.BlockSpec((tm, tn), lambda i, j, k: (i, j)),
        scratch_shapes=[pltpu.VMEM((tm, tn), jnp.float32)],
        compiler_params=pltpu.CompilerParams(
            dimension_semantics=("parallel", "parallel", "arbitrary"),
            vmem_limit_bytes=vmem_limit),
    )(x, w, b)


# ------------------------------------------------------------------------------- model
class FullyConnectedNeuralNetworkPallas:
    """JAX/Pallas re-implementation of molecule_chef FullyConnectedNeuralNetwork."""

    def __init__(self, input_dim, output_dim, hidden_sizes, key, *, force_tiled=False):
        self.input_dim = int(input_dim)
        self.output_dim = int(output_dim)
        self.layer_sizes = ([self.input_dim] + [int(h) for h in hidden_sizes]
                            + [self.output_dim])

        self.params = []          # (w_t (in,out) f32, b (1,out) f32) for the reference
        self.padded_params = []   # (w_pad bf16 (in_pad,out_pad), b_pad f32 (1,out_pad))
        for fan_in, fan_out in zip(self.layer_sizes[:-1], self.layer_sizes[1:]):
            key, kw, kb = jax.random.split(key, 3)
            # PyTorch nn.Linear default init: U(-1/sqrt(fan_in), 1/sqrt(fan_in))
            bound = 1.0 / (fan_in ** 0.5)
            w = jax.random.uniform(kw, (fan_out, fan_in), jnp.float32, -bound, bound)
            b = jax.random.uniform(kb, (fan_out,), jnp.float32, -bound, bound)
            w_t = w.T                                   # (in, out): kernel does x @ W_t + b
            b2 = b.reshape(1, fan_out)

            in_pad = _pad_feature(fan_in)
            out_pad = _pad_feature(fan_out)
            w_pad = (jnp.zeros((in_pad, out_pad), jnp.float32)
                     .at[:fan_in, :fan_out].set(w_t).astype(jnp.bfloat16))
            b_pad = jnp.zeros((1, out_pad), jnp.float32).at[:, :fan_out].set(b2)
            self.padded_params.append((w_pad, b_pad))
            # Reference uses the SAME bf16-rounded weights; kernel vs reference then only
            # differs by activation rounding to bf16 / MXU accumulation order.
            self.params.append((w_pad[:fan_in, :fan_out].astype(jnp.float32), b2))

        self._vmem_cap = _vmem_capacity_bytes()
        self._resident_bytes = sum(
            w.size * w.dtype.itemsize + b.size * b.dtype.itemsize
            for w, b in self.padded_params)
        # Resident fused path only if single-buffered weights leave headroom for the
        # double-buffered activation tiles + live vregs; otherwise K/N-tiled fallback.
        self.use_resident = (not force_tiled) and (
            self._resident_bytes <= int(0.6 * self._vmem_cap))

        self._forward = jax.jit(self._forward_impl)

    def _vmem_limit(self, tile_bytes: int) -> int:
        need = self._resident_bytes + 2 * tile_bytes + (8 << 20)
        cap = self._vmem_cap - (8 << 20)          # 56 MiB on v7x, 120 MiB on v5e/v6e
        return int(min(max(need, 32 << 20), cap))

    def _forward_impl(self, x):
        batch = x.shape[0]
        in_pad = self.padded_params[0][0].shape[0]
        out_pad = self.padded_params[-1][0].shape[1]

        batch_pad8 = _round_up(max(batch, 1), 8)
        tb = _choose_batch_tile(batch_pad8)

        x_pad = jnp.zeros((batch_pad8, in_pad), jnp.float32)
        x_pad = x_pad.at[:batch, :self.input_dim].set(x.astype(jnp.float32))

        if self.use_resident:
            max_feat = max(in_pad, out_pad,
                           *[w.shape[1] for w, _ in self.padded_params])
            tile_bytes = tb * (in_pad + out_pad + 2 * max_feat) * 4
            y_pad = _fused_mlp(x_pad, self.padded_params, batch_tile=tb,
                               vmem_limit=self._vmem_limit(tile_bytes))
        else:
            # Per-layer tiled fallback; inter-layer activations stay bf16 in HBM.
            h = x_pad.astype(jnp.bfloat16)
            vmem_limit = int(min(self._vmem_cap - (8 << 20), 64 << 20))
            n_layers = len(self.padded_params)
            for i, (w, b) in enumerate(self.padded_params):
                last = i == n_layers - 1
                h = _tiled_linear(h, w, b, apply_relu=not last,
                                  out_dtype=jnp.float32 if last else jnp.bfloat16,
                                  batch_tile=tb, vmem_limit=vmem_limit)
            y_pad = h

        return y_pad[:batch, :self.output_dim]

    def __call__(self, x):
        if x.shape[0] == 0:
            return jnp.zeros((0, self.output_dim), jnp.float32)
        return self._forward(x)


def _reference(x, params):
    # Pure-JAX f32 reference (matches the PyTorch forward pass, with bf16-rounded weights).
    h = x.astype(jnp.float32)
    for i, (w_t, b) in enumerate(params):
        h = h @ w_t + b
        if i < len(params) - 1:
            h = jnp.maximum(h, 0.0)
    return h


if __name__ == "__main__":
    key = jax.random.PRNGKey(0)
    key_model, key_x = jax.random.split(key)

    batch = 2
    input_dim = 16
    hidden_sizes = [32, 32]
    output_dim = 8

    model = FullyConnectedNeuralNetworkPallas(input_dim, output_dim, hidden_sizes,
                                              key_model)
    x = jax.random.normal(key_x, (batch, input_dim), jnp.float32)

    out = jax.block_until_ready(model(x))
    ref = _reference(x, model.params)
    assert out.shape == (batch, output_dim)
    # bf16 MXU operands -> looser tolerance than a pure-f32 path.
    assert jnp.allclose(out, ref, atol=5e-2, rtol=5e-2), float(jnp.max(jnp.abs(out - ref)))

    # Also exercise the K/N-tiled fallback path (used when weights outgrow VMEM residency).
    model_tiled = FullyConnectedNeuralNetworkPallas(
        input_dim, output_dim, hidden_sizes, key_model, force_tiled=True)
    out_tiled = jax.block_until_ready(model_tiled(x))
    assert out_tiled.shape == (batch, output_dim)
    assert jnp.allclose(out_tiled, ref, atol=5e-2, rtol=5e-2)

    print("KERNEL_OK")
</pallas_src>

<mosaic_0001>
module attributes {stable_mosaic.version = 11 : i64} {
  func.func @_fused_mlp_kernel(%arg0: i32, %arg1: memref<8x128xf32, #tpu.memory_space<vmem>>, %arg2: memref<128x128xbf16, #tpu.memory_space<vmem>>, %arg3: memref<1x128xf32, #tpu.memory_space<vmem>>, %arg4: memref<128x128xbf16, #tpu.memory_space<vmem>>, %arg5: memref<1x128xf32, #tpu.memory_space<vmem>>, %arg6: memref<128x128xbf16, #tpu.memory_space<vmem>>, %arg7: memref<1x128xf32, #tpu.memory_space<vmem>>, %arg8: memref<8x128xf32, #tpu.memory_space<vmem>>) attributes {dimension_semantics = [#tpu.dimension_semantics<parallel>], iteration_bounds = array<i64: 1>, scalar_prefetch = 0 : i64, scratch_operands = 0 : i64, tpu.core_type = #tpu.core_type<tc>, window_params = [{transform_indices = @transform_0, window_bounds = array<i64: 8, 128>}, {pipeline_mode = #tpu.pipeline_mode<synchronous>, transform_indices = @transform_1, window_bounds = array<i64: 128, 128>}, {pipeline_mode = #tpu.pipeline_mode<synchronous>, transform_indices = @transform_2, window_bounds = array<i64: 1, 128>}, {pipeline_mode = #tpu.pipeline_mode<synchronous>, transform_indices = @transform_3, window_bounds = array<i64: 128, 128>}, {pipeline_mode = #tpu.pipeline_mode<synchronous>, transform_indices = @transform_4, window_bounds = array<i64: 1, 128>}, {pipeline_mode = #tpu.pipeline_mode<synchronous>, transform_indices = @transform_5, window_bounds = array<i64: 128, 128>}, {pipeline_mode = #tpu.pipeline_mode<synchronous>, transform_indices = @transform_6, window_bounds = array<i64: 1, 128>}, {transform_indices = @transform_7, window_bounds = array<i64: 8, 128>}]} {
    %c0 = arith.constant 0 : index
    %c0_0 = arith.constant 0 : index
    %0 = vector.load %arg1[%c0, %c0_0] : memref<8x128xf32, #tpu.memory_space<vmem>>, vector<8x128xf32>
    %c0_1 = arith.constant 0 : index
    %c0_2 = arith.constant 0 : index
    %1 = vector.load %arg2[%c0_1, %c0_2] : memref<128x128xbf16, #tpu.memory_space<vmem>>, vector<128x128xbf16>
    %c0_3 = arith.constant 0 : index
    %c0_4 = arith.constant 0 : index
    %2 = vector.load %arg3[%c0_3, %c0_4] : memref<1x128xf32, #tpu.memory_space<vmem>>, vector<1x128xf32>
    %3 = arith.truncf %0 : vector<8x128xf32> to vector<8x128xbf16>
    %cst = arith.constant dense<0.000000e+00> : vector<8x128xf32>
    %4 = tpu.matmul %3, %1, %cst {dimension_numbers = #tpu.dot_dimension_numbers<[1], [0], [0], [1], [0, 0, 1, 1], [], []>} : vector<8x128xbf16>, vector<128x128xbf16>, vector<8x128xf32> -> vector<8x128xf32>
    %5 = vector.broadcast %2 : vector<1x128xf32> to vector<8x128xf32>
    %6 = arith.addf %4, %5 : vector<8x128xf32>
    %cst_5 = arith.constant 0.000000e+00 : f32
    %7 = vector.broadcast %cst_5 : f32 to vector<8x128xf32>
    %8 = arith.maximumf %6, %7 : vector<8x128xf32>
    %c0_6 = arith.constant 0 : index
    %c0_7 = arith.constant 0 : index
    %9 = vector.load %arg4[%c0_6, %c0_7] : memref<128x128xbf16, #tpu.memory_space<vmem>>, vector<128x128xbf16>
    %c0_8 = arith.constant 0 : index
    %c0_9 = arith.constant 0 : index
    %10 = vector.load %arg5[%c0_8, %c0_9] : memref<1x128xf32, #tpu.memory_space<vmem>>, vector<1x128xf32>
    %11 = arith.truncf %8 : vector<8x128xf32> to vector<8x128xbf16>
    %cst_10 = arith.constant dense<0.000000e+00> : vector<8x128xf32>
    %12 = tpu.matmul %11, %9, %cst_10 {dimension_numbers = #tpu.dot_dimension_numbers<[1], [0], [0], [1], [0, 0, 1, 1], [], []>} : vector<8x128xbf16>, vector<128x128xbf16>, vector<8x128xf32> -> vector<8x128xf32>
    %13 = vector.broadcast %10 : vector<1x128xf32> to vector<8x128xf32>
    %14 = arith.addf %12, %13 : vector<8x128xf32>
    %cst_11 = arith.constant 0.000000e+00 : f32
    %15 = vector.broadcast %cst_11 : f32 to vector<8x128xf32>
    %16 = arith.maximumf %14, %15 : vector<8x128xf32>
    %c0_12 = arith.constant 0 : index
    %c0_13 = arith.constant 0 : index
    %17 = vector.load %arg6[%c0_12, %c0_13] : memref<128x128xbf16, #tpu.memory_space<vmem>>, vector<128x128xbf16>
    %c0_14 = arith.constant 0 : index
    %c0_15 = arith.constant 0 : index
    %18 = vector.load %arg7[%c0_14, %c0_15] : memref<1x128xf32, #tpu.memory_space<vmem>>, vector<1x128xf32>
    %19 = arith.truncf %16 : vector<8x128xf32> to vector<8x128xbf16>
    %cst_16 = arith.constant dense<0.000000e+00> : vector<8x128xf32>
    %20 = tpu.matmul %19, %17, %cst_16 {dimension_numbers = #tpu.dot_dimension_numbers<[1], [0], [0], [1], [0, 0, 1, 1], [], []>} : vector<8x128xbf16>, vector<128x128xbf16>, vector<8x128xf32> -> vector<8x128xf32>
    %21 = vector.broadcast %18 : vector<1x128xf32> to vector<8x128xf32>
    %22 = arith.addf %20, %21 : vector<8x128xf32>
    %c0_17 = arith.constant 0 : index
    %c0_18 = arith.constant 0 : index
    %23 = vector.load %arg8[%c0_17, %c0_18] : memref<8x128xf32, #tpu.memory_space<vmem>>, vector<8x128xf32>
    tpu.vector_store %arg8[%c0_17, %c0_18], %22 {strides = array<i32>} : memref<8x128xf32, #tpu.memory_space<vmem>>, vector<8x128xf32>,
    return
  }
  func.func @transform_0(%arg0: i32) -> (i32, i32) {
    %c0_i32 = arith.constant 0 : i32
    %c0_i32_0 = arith.constant 0 : i32
    return %arg0, %c0_i32 : i32, i32
  }
  func.func @transform_1(%arg0: i32) -> (i32, i32) {
    %c0_i32 = arith.constant 0 : i32
    %c0_i32_0 = arith.constant 0 : i32
    %c0_i32_1 = arith.constant 0 : i32
    return %c0_i32, %c0_i32_0 : i32, i32
  }
  func.func @transform_2(%arg0: i32) -> (i32, i32) {
    %c0_i32 = arith.constant 0 : i32
    %c0_i32_0 = arith.constant 0 : i32
    %c0_i32_1 = arith.constant 0 : i32
    return %c0_i32, %c0_i32_0 : i32, i32
  }
  func.func @transform_3(%arg0: i32) -> (i32, i32) {
    %c0_i32 = arith.constant 0 : i32
    %c0_i32_0 = arith.constant 0 : i32
    %c0_i32_1 = arith.constant 0 : i32
    return %c0_i32, %c0_i32_0 : i32, i32
  }
  func.func @transform_4(%arg0: i32) -> (i32, i32) {
    %c0_i32 = arith.constant 0 : i32
    %c0_i32_0 = arith.constant 0 : i32
    %c0_i32_1 = arith.constant 0 : i32
    return %c0_i32, %c0_i32_0 : i32, i32
  }
  func.func @transform_5(%arg0: i32) -> (i32, i32) {
    %c0_i32 = arith.constant 0 : i32
    %c0_i32_0 = arith.constant 0 : i32
    %c0_i32_1 = arith.constant 0 : i32
    return %c0_i32, %c0_i32_0 : i32, i32
  }
  func.func @transform_6(%arg0: i32) -> (i32, i32) {
    %c0_i32 = arith.constant 0 : i32
    %c0_i32_0 = arith.constant 0 : i32
    %c0_i32_1 = arith.constant 0 : i32
    return %c0_i32, %c0_i32_0 : i32, i32
  }
  func.func @transform_7(%arg0: i32) -> (i32, i32) {
    %c0_i32 = arith.constant 0 : i32
    %c0_i32_0 = arith.constant 0 : i32
    return %arg0, %c0_i32 : i32, i32
  }
}

</mosaic_0001>

<llo_original>
// kernel: _forward_impl.1
$region0: #{_forward_impl.1}
  #allocation0 [shape = 'u32[]', space=smem, size = 0x4, offset = 0x4, fixed_abs, tag = 'smem constant byte address 0x4 - core index']
  #allocation1 [shape = 'u32[72,128]{1,0:T(1,128)}', space=vmem, size = 0x9000, scoped, tag = 'internal scratch']
  %s0 = inlined_call_operand.vmem [shape: f32[8,128], index: 0, kind: input, shape index: {}]
  %s1 = inlined_call_operand.hbm [shape: bf16[128,128], index: 1, kind: input, shape index: {}]
  %s2 = inlined_call_operand.vmem [shape: f32[1,128], index: 2, kind: input, shape index: {}]
  %s3 = inlined_call_operand.hbm [shape: bf16[128,128], index: 3, kind: input, shape index: {}]
  %s4 = inlined_call_operand.vmem [shape: f32[1,128], index: 4, kind: input, shape index: {}]
  %s5 = inlined_call_operand.hbm [shape: bf16[128,128], index: 5, kind: input, shape index: {}]
  %s6 = inlined_call_operand.vmem [shape: f32[1,128], index: 6, kind: input, shape index: {}]
  %s7 = inlined_call_operand.vmem [shape: f32[8,128], index: 7, kind: output, shape index: {}]
  %s8 = sld [smem:[#allocation0]]
  $region50: #{_forward_impl.1} parent=0
    _
  %s10 = ssub.s32 1, %s8
  %s11 = scalar_select 0, %s10, %s8
  $region1: #{_forward_impl.1} parent=0
    #allocation2 [shape = 'u8[32768]{0}', space=vmem, size = 0x8000, scoped, tag = 'input window, operand 1, single buffered']
    #allocation3 [shape = 's32[1]{0}', space=sflag, size = 0x4, scoped, tag = 'scoped memory for _forward_impl.1']
    #allocation4 [shape = 'u8[32768]{0}', space=vmem, size = 0x8000, scoped, tag = 'input window, operand 3, single buffered']
    #allocation5 [shape = 's32[1]{0}', space=sflag, size = 0x4, scoped, tag = 'scoped memory for _forward_impl.1']
    #allocation6 [shape = 'u8[32768]{0}', space=vmem, size = 0x8000, scoped, tag = 'input window, operand 5, single buffered']
    %12 = vsyncpa [#allocation3], 0
    %13 = vsyncpa [#allocation5], 0
    // Predicated region
    $region2: #{_forward_impl.1} parent=1 // pred_check
      _
    $region3: #{_forward_impl.1} parent=1 // pred_check_branch
      %15 = sbr.rel (0) target = $region5
    $region4: #{_forward_impl.1} parent=1 // pred_region
      _
    $region5: #{_forward_impl.1} parent=1 // pred_fallthru
      _
    // Predicated region
    $region6: #{_forward_impl.1} parent=1 // pred_check
      _
    $region7: #{_forward_impl.1} parent=1 // pred_check_branch
      %17 = sbr.rel (0) target = $region9
    $region8: #{_forward_impl.1} parent=1 // pred_region
      %19 = vsyncadd [#allocation3], 0
      %s20 = sshll.u32 %s1, 4
      %s21 = int_to_ptr.hbm [resolvable:$true] %s20
      %s22 = sshll.u32 [#allocation2], 4
      %s23 = int_to_ptr.vmem [resolvable:$true] %s22
      %28 = dma.hbm_to_vmem [thread:$0]  %s21, 1024, %s23, [#allocation3], 64, 64, 4
    $region9: #{_forward_impl.1} parent=1 // pred_fallthru
      _
    // Predicated region
    $region10: #{_forward_impl.1} parent=1 // pred_check
      _
    $region11: #{_forward_impl.1} parent=1 // pred_check_branch
      %30 = sbr.rel (0) target = $region13
    $region12: #{_forward_impl.1} parent=1 // pred_region
      _
    $region13: #{_forward_impl.1} parent=1 // pred_fallthru
      _
    // Predicated region
    $region14: #{_forward_impl.1} parent=1 // pred_check
      _
    $region15: #{_forward_impl.1} parent=1 // pred_check_branch
      %32 = sbr.rel (0) target = $region17
    $region16: #{_forward_impl.1} parent=1 // pred_region
      %34 = vsyncadd [#allocation5], 0
      %s35 = sshll.u32 %s3, 4
      %s36 = int_to_ptr.hbm [resolvable:$true] %s35
      %s37 = sshll.u32 [#allocation4], 4
      %s38 = int_to_ptr.vmem [resolvable:$true] %s37
      %43 = dma.hbm_to_vmem [thread:$0]  %s36, 1024, %s38, [#allocation5], 64, 64, 4
    $region17: #{_forward_impl.1} parent=1 // pred_fallthru
      _
    // Predicated region
    $region18: #{_forward_impl.1} parent=1 // pred_check
      _
    $region19: #{_forward_impl.1} parent=1 // pred_check_branch
      %45 = sbr.rel (0) target = $region21
    $region20: #{_forward_impl.1} parent=1 // pred_region
      _
    $region21: #{_forward_impl.1} parent=1 // pred_fallthru
      _
    // Predicated region
    $region22: #{_forward_impl.1} parent=1 // pred_check
      _
    $region23: #{_forward_impl.1} parent=1 // pred_check_branch
      %47 = sbr.rel (0) target = $region25
    $region24: #{_forward_impl.1} parent=1 // pred_region
      %49 = vsyncadd [#allocation5], 0
      %s50 = sshll.u32 %s5, 4
      %s51 = int_to_ptr.hbm [resolvable:$true] %s50
      %s52 = sshll.u32 [#allocation6], 4
      %s53 = int_to_ptr.vmem [resolvable:$true] %s52
      %58 = dma.hbm_to_vmem [thread:$0]  %s51, 1024, %s53, [#allocation5], 64, 64, 4
    $region25: #{_forward_impl.1} parent=1 // pred_fallthru
      _
    // Predicated region
    $region26: #{_forward_impl.1} parent=1 // pred_check
      _
    $region27: #{_forward_impl.1} parent=1 // pred_check_branch
      %60 = sbr.rel (0) target = $region29
    $region28: #{_forward_impl.1} parent=1 // pred_region
      _
    $region29: #{_forward_impl.1} parent=1 // pred_fallthru
      _
    // Predicated region
    $region30: #{_forward_impl.1} parent=1 // pred_check
      _
    $region31: #{_forward_impl.1} parent=1 // pred_check_branch
      %62 = sbr.rel (0) target = $region33
    $region32: #{_forward_impl.1} parent=1 // pred_region
      %64 = dma.done [#allocation3], 1024
    $region33: #{_forward_impl.1} parent=1 // pred_fallthru
      _
    // Predicated region
    $region34: #{_forward_impl.1} parent=1 // pred_check
      _
    $region35: #{_forward_impl.1} parent=1 // pred_check_branch
      %66 = sbr.rel (0) target = $region37
    $region36: #{_forward_impl.1} parent=1 // pred_region
      %68 = dma.done [#allocation5], 1024
    $region37: #{_forward_impl.1} parent=1 // pred_fallthru
      _
    // Predicated region
    $region38: #{_forward_impl.1} parent=1 // pred_check
      _
    $region39: #{_forward_impl.1} parent=1 // pred_check_branch
      %70 = sbr.rel (0) target = $region41
    $region40: #{_forward_impl.1} parent=1 // pred_region
      %72 = dma.done [#allocation5], 1024
    $region41: #{_forward_impl.1} parent=1 // pred_fallthru
      _
    %v73 = vld [vmem:[%s0] sm:$0xff]
    %v74 = vld [vmem:[#allocation2] sm:$0xf]
    %v75 = vld [vmem:[#allocation2 + $0x4] sm:$0xf]
    %v76 = vld [vmem:[#allocation2 + $0x8] sm:$0xf]
    %v77 = vld [vmem:[#allocation2 + $0xc] sm:$0xf]
    %v78 = vld [vmem:[#allocation2 + $0x10] sm:$0xf]
    %v79 = vld [vmem:[#allocation2 + $0x14] sm:$0xf]
    %v80 = vld [vmem:[#allocation2 + $0x18] sm:$0xf]
    %v81 = vld [vmem:[#allocation2 + $0x1c] sm:$0xf]
    %v82 = vld [vmem:[#allocation2 + $0x20] sm:$0xf]
    %v83 = vld [vmem:[#allocation2 + $0x24] sm:$0xf]
    %v84 = vld [vmem:[#allocation2 + $0x28] sm:$0xf]
    %v85 = vld [vmem:[#allocation2 + $0x2c] sm:$0xf]
    %v86 = vld [vmem:[#allocation2 + $0x30] sm:$0xf]
    %v87 = vld [vmem:[#allocation2 + $0x34] sm:$0xf]
    %v88 = vld [vmem:[#allocation2 + $0x38] sm:$0xf]
    %v89 = vld [vmem:[#allocation2 + $0x3c] sm:$0xf]
    %v90 = vld [vmem:[%s2] sm:$0x1]
    %v91 = vpack.c.bf16 %v73, %v73
    %v93 = vperm.slane %v90, 0
    %v111 = vunpack.c.l.b16 %v74
    %v112 = vunpack.c.l.b16 %v75
    %v113 = vunpack.c.l.b16 %v76
    %v114 = vunpack.c.l.b16 %v77
    %v115 = vunpack.c.l.b16 %v78
    %v116 = vunpack.c.l.b16 %v79
    %v117 = vunpack.c.l.b16 %v80
    %v118 = vunpack.c.l.b16 %v81
    %v119 = vunpack.c.l.b16 %v82
    %v120 = vunpack.c.l.b16 %v83
    %v121 = vunpack.c.l.b16 %v84
    %v122 = vunpack.c.l.b16 %v85
    %v123 = vunpack.c.l.b16 %v86
    %v124 = vunpack.c.l.b16 %v87
    %v125 = vunpack.c.l.b16 %v88
    %v126 = vunpack.c.l.b16 %v89
    %v127 = vpack.c.b16 %v112, %v111
    %v128 = vpack.c.b16 %v114, %v113
    %v129 = vpack.c.b16 %v116, %v115
    %v130 = vpack.c.b16 %v118, %v117
    %v131 = vpack.c.b16 %v120, %v119
    %v132 = vpack.c.b16 %v122, %v121
    %v133 = vpack.c.b16 %v124, %v123
    %v134 = vpack.c.b16 %v126, %v125
    %143 = vmatpush.bf16.msra.mxu0 %v134
    %144 = vmatpush.bf16.msra.mxu0 %v133
    %145 = vmatpush.bf16.msra.mxu0 %v132
    %146 = vmatpush.bf16.msra.mxu0 %v131
    %147 = vmatpush.bf16.msra.mxu0 %v130
    %148 = vmatpush.bf16.msra.mxu0 %v129
    %149 = vmatpush.bf16.msra.mxu0 %v128
    %150 = vmatpush.bf16.msra.mxu0 %v127
    %151 = vmatmul.bf16.gmra.mxu0 %v91
    %v152 = vpop.f32.mrf.mxu0
    %v153 = vadd.f32 %v93, %v152
    %v154 = vpop.f32.mrf.mxu0
    %155 = vdwg.mxu0
    %v156 = vmax.f32 %v153, 0.0
    %v157 = vld [vmem:[#allocation4] sm:$0xf]
    %v158 = vld [vmem:[#allocation4 + $0x4] sm:$0xf]
    %v159 = vld [vmem:[#allocation4 + $0x8] sm:$0xf]
    %v160 = vld [vmem:[#allocation4 + $0xc] sm:$0xf]
    %v161 = vld [vmem:[#allocation4 + $0x10] sm:$0xf]
    %v162 = vld [vmem:[#allocation4 + $0x14] sm:$0xf]
    %v163 = vld [vmem:[#allocation4 + $0x18] sm:$0xf]
    %v164 = vld [vmem:[#allocation4 + $0x1c] sm:$0xf]
    %v165 = vld [vmem:[#allocation4 + $0x20] sm:$0xf]
    %v166 = vld [vmem:[#allocation4 + $0x24] sm:$0xf]
    %v167 = vld [vmem:[#allocation4 + $0x28] sm:$0xf]
    %v168 = vld [vmem:[#allocation4 + $0x2c] sm:$0xf]
    %v169 = vld [vmem:[#allocation4 + $0x30] sm:$0xf]
    %v170 = vld [vmem:[#allocation4 + $0x34] sm:$0xf]
    %v171 = vld [vmem:[#allocation4 + $0x38] sm:$0xf]
    %v172 = vld [vmem:[#allocation4 + $0x3c] sm:$0xf]
    %v173 = vld [vmem:[%s4] sm:$0x1]
    %v174 = vpack.c.bf16 %v156, %v156
    %v176 = vperm.slane %v173, 0
    %v194 = vunpack.c.l.b16 %v157
    %v195 = vunpack.c.l.b16 %v158
    %v196 = vunpack.c.l.b16 %v159
    %v197 = vunpack.c.l.b16 %v160
    %v198 = vunpack.c.l.b16 %v161
    %v199 = vunpack.c.l.b16 %v162
    %v200 = vunpack.c.l.b16 %v163
    %v201 = vunpack.c.l.b16 %v164
    %v202 = vunpack.c.l.b16 %v165
    %v203 = vunpack.c.l.b16 %v166
    %v204 = vunpack.c.l.b16 %v167
    %v205 = vunpack.c.l.b16 %v168
    %v206 = vunpack.c.l.b16 %v169
    %v207 = vunpack.c.l.b16 %v170
    %v208 = vunpack.c.l.b16 %v171
    %v209 = vunpack.c.l.b16 %v172
    %v210 = vpack.c.b16 %v195, %v194
    %v211 = vpack.c.b16 %v197, %v196
    %v212 = vpack.c.b16 %v199, %v198
    %v213 = vpack.c.b16 %v201, %v200
    %v214 = vpack.c.b16 %v203, %v202
    %v215 = vpack.c.b16 %v205, %v204
    %v216 = vpack.c.b16 %v207, %v206
    %v217 = vpack.c.b16 %v209, %v208
    %226 = vmatpush.bf16.msra.mxu0 %v217
    %227 = vmatpush.bf16.msra.mxu0 %v216
    %228 = vmatpush.bf16.msra.mxu0 %v215
    %229 = vmatpush.bf16.msra.mxu0 %v214
    %230 = vmatpush.bf16.msra.mxu0 %v213
    %231 = vmatpush.bf16.msra.mxu0 %v212
    %232 = vmatpush.bf16.msra.mxu0 %v211
    %233 = vmatpush.bf16.msra.mxu0 %v210
    %234 = vmatmul.bf16.gmra.mxu0 %v174
    %v235 = vpop.f32.mrf.mxu0
    %v236 = vadd.f32 %v176, %v235
    %v237 = vpop.f32.mrf.mxu0
    %238 = vdwg.mxu0
    %v239 = vmax.f32 %v236, 0.0
    %v240 = vld [vmem:[#allocation6] sm:$0xf]
    %v241 = vld [vmem:[#allocation6 + $0x4] sm:$0xf]
    %v242 = vld [vmem:[#allocation6 + $0x8] sm:$0xf]
    %v243 = vld [vmem:[#allocation6 + $0xc] sm:$0xf]
    %v244 = vld [vmem:[#allocation6 + $0x10] sm:$0xf]
    %v245 = vld [vmem:[#allocation6 + $0x14] sm:$0xf]
    %v246 = vld [vmem:[#allocation6 + $0x18] sm:$0xf]
    %v247 = vld [vmem:[#allocation6 + $0x1c] sm:$0xf]
    %v248 = vld [vmem:[#allocation6 + $0x20] sm:$0xf]
    %v249 = vld [vmem:[#allocation6 + $0x24] sm:$0xf]
    %v250 = vld [vmem:[#allocation6 + $0x28] sm:$0xf]
    %v251 = vld [vmem:[#allocation6 + $0x2c] sm:$0xf]
    %v252 = vld [vmem:[#allocation6 + $0x30] sm:$0xf]
    %v253 = vld [vmem:[#allocation6 + $0x34] sm:$0xf]
    %v254 = vld [vmem:[#allocation6 + $0x38] sm:$0xf]
    %v255 = vld [vmem:[#allocation6 + $0x3c] sm:$0xf]
    %v256 = vld [vmem:[%s6] sm:$0x1]
    %v257 = vpack.c.bf16 %v239, %v239
    %v259 = vperm.slane %v256, 0
    %v277 = vunpack.c.l.b16 %v240
    %v278 = vunpack.c.l.b16 %v241
    %v279 = vunpack.c.l.b16 %v242
    %v280 = vunpack.c.l.b16 %v243
    %v281 = vunpack.c.l.b16 %v244
    %v282 = vunpack.c.l.b16 %v245
    %v283 = vunpack.c.l.b16 %v246
    %v284 = vunpack.c.l.b16 %v247
    %v285 = vunpack.c.l.b16 %v248
    %v286 = vunpack.c.l.b16 %v249
    %v287 = vunpack.c.l.b16 %v250
    %v288 = vunpack.c.l.b16 %v251
    %v289 = vunpack.c.l.b16 %v252
    %v290 = vunpack.c.l.b16 %v253
    %v291 = vunpack.c.l.b16 %v254
    %v292 = vunpack.c.l.b16 %v255
    %v293 = vpack.c.b16 %v278, %v277
    %v294 = vpack.c.b16 %v280, %v279
    %v295 = vpack.c.b16 %v282, %v281
    %v296 = vpack.c.b16 %v284, %v283
    %v297 = vpack.c.b16 %v286, %v285
    %v298 = vpack.c.b16 %v288, %v287
    %v299 = vpack.c.b16 %v290, %v289
    %v300 = vpack.c.b16 %v292, %v291
    %309 = vmatpush.bf16.msra.mxu0 %v300
    %310 = vmatpush.bf16.msra.mxu0 %v299
    %311 = vmatpush.bf16.msra.mxu0 %v298
    %312 = vmatpush.bf16.msra.mxu0 %v297
    %313 = vmatpush.bf16.msra.mxu0 %v296
    %314 = vmatpush.bf16.msra.mxu0 %v295
    %315 = vmatpush.bf16.msra.mxu0 %v294
    %316 = vmatpush.bf16.msra.mxu0 %v293
    %317 = vmatmul.bf16.gmra.mxu0 %v257
    %v318 = vpop.f32.mrf.mxu0
    %v319 = vadd.f32 %v259, %v318
    %v320 = vpop.f32.mrf.mxu0
    %321 = vdwg.mxu0
    %322 = vst [vmem:[%s7] sm:$0xff] %v319
    // Predicated region
    $region42: #{_forward_impl.1} parent=1 // pred_check
      _
    $region43: #{_forward_impl.1} parent=1 // pred_check_branch
      %324 = sbr.rel (0) target = $region45
    $region44: #{_forward_impl.1} parent=1 // pred_region
      _
    $region45: #{_forward_impl.1} parent=1 // pred_fallthru
      _
    // Predicated region
    $region46: #{_forward_impl.1} parent=1 // pred_check
      _
    $region47: #{_forward_impl.1} parent=1 // pred_check_branch
      %326 = sbr.rel (0) target = $region49
    $region48: #{_forward_impl.1} parent=1 // pred_region
      _
    $region49: #{_forward_impl.1} parent=1 // pred_fallthru
      _
    %327 = vsyncpa [#allocation3], 1
    %328 = vsyncpa [#allocation5], 1

</llo_original>
